<compile_context>
chip_gen: v7x
topology: tpu7x:2x2x1
jax: 0.10.0
libtpu: 0.0.40
codegen_flags: <defaults>
</compile_context>

<pallas_src>
import jax
import jax.numpy as jnp
from jax.experimental import pallas as pl
from jax.experimental.pallas import tpu as pltpu


TILE_B = 2048         # max batch tile (rows per grid step), multiple of 8


def _round_up(n, m):
    return ((n + m - 1) // m) * m


def _mlp_kernel(x_ref,
                w1_ref, b1_ref,
                w2_ref, b2_ref,
                w3_ref, b3_ref,
                w4_ref, b4_ref,
                o_ref):
    # x_ref: (T, 4) f32; w2/w3/w4 may be bf16; biases f32; o_ref: (T, 20) f32.
    x = x_ref[...]
    w1 = w1_ref[...]

    # ---- layer 1 (in=4): 4 broadcast FMAs on the VPU, skip the K=4 MXU matmul ----
    h = b1_ref[...] + x[:, 0:1] * w1[0:1, :]
    h = h + x[:, 1:2] * w1[1:2, :]
    h = h + x[:, 2:3] * w1[2:3, :]
    h = h + x[:, 3:4] * w1[3:4, :]
    h = jnp.maximum(h, 0.0)

    # ---- layer 2: 64 -> 128 (bf16 operands, f32 accumulate) ----
    h = jnp.dot(h.astype(w2_ref.dtype), w2_ref[...],
                preferred_element_type=jnp.float32) + b2_ref[...]
    h = jnp.maximum(h, 0.0)

    # ---- layer 3: 128 -> 64 ----
    h = jnp.dot(h.astype(w3_ref.dtype), w3_ref[...],
                preferred_element_type=jnp.float32) + b3_ref[...]
    h = jnp.maximum(h, 0.0)

    # ---- layer 4: 64 -> 20, stored at natural 20-wide layout ----
    h = jnp.dot(h.astype(w4_ref.dtype), w4_ref[...],
                preferred_element_type=jnp.float32) + b4_ref[...]

    o_ref[...] = h.astype(o_ref.dtype)


def prepare_params(params, use_bf16=True):
    """One-time parameter prep (do NOT call per forward).

    Casts the MXU-facing weights (w2, w3, w4) to bf16; biases and w1 (VPU/FMA
    path) stay f32.  With use_bf16=False the kernel matches f32 PyTorch exactly.
    """
    prepared = dict(params)
    if use_bf16:
        for k in ("w2", "w3", "w4"):
            prepared[k] = params[k].astype(jnp.bfloat16)
    return prepared


def pump_classifier_forward(x, params, tile_b=TILE_B):
    """x: [B, 4] float32. params: output of prepare_params (w1..w4 [in,out], b1..b4 [1,out])."""
    B = x.shape[0]
    out_dim = params["w4"].shape[1]  # 20

    # Batch tile: multiple of 8, capped so mid-sized batches produce >= 2 grid
    # steps (gives both v7x TensorCores work via the "parallel" batch axis).
    tb = min(tile_b, _round_up(max(pl.cdiv(B, 2), 1), 8))
    b_pad = _round_up(B, tb)
    if b_pad != B:
        x = jnp.pad(x, ((0, b_pad - B), (0, 0)))

    grid = (b_pad // tb,)

    def resident(arr):
        # Weights/biases: same block every grid step -> stay VMEM-resident.
        return pl.BlockSpec(arr.shape, lambda i: (0, 0))

    in_specs = [
        pl.BlockSpec((tb, 4), lambda i: (i, 0)),       # x: tiled along batch
        resident(params["w1"]), resident(params["b1"]),
        resident(params["w2"]), resident(params["b2"]),
        resident(params["w3"]), resident(params["b3"]),
        resident(params["w4"]), resident(params["b4"]),
    ]
    # Output block last dim == full array dim (20) -> legal, no lane padding,
    # no wrapper column-slice pass.
    out_specs = pl.BlockSpec((tb, out_dim), lambda i: (i, 0))

    flops = 2 * b_pad * (4 * 64 + 64 * 128 + 128 * 64 + 64 * out_dim)
    param_bytes = sum(int(params[k].size) * params[k].dtype.itemsize
                      for k in ("w1", "b1", "w2", "b2", "w3", "b3", "w4", "b4"))
    bytes_accessed = int(x.size) * x.dtype.itemsize + b_pad * out_dim * 4 + param_bytes

    out = pl.pallas_call(
        _mlp_kernel,
        out_shape=jax.ShapeDtypeStruct((b_pad, out_dim), jnp.float32),
        grid=grid,
        in_specs=in_specs,
        out_specs=out_specs,
        compiler_params=pltpu.CompilerParams(
            dimension_semantics=("parallel",)),        # megacore batch split on v7x
        cost_estimate=pl.CostEstimate(
            flops=flops, transcendentals=0, bytes_accessed=bytes_accessed),
    )(x,
      params["w1"], params["b1"],
      params["w2"], params["b2"],
      params["w3"], params["b3"],
      params["w4"], params["b4"])

    return out[:B] if b_pad != B else out


def init_params(key):
    """Deterministic init mimicking PyTorch nn.Linear default (U[-1/sqrt(fan_in), 1/sqrt(fan_in)])."""
    dims = [(4, 64), (64, 128), (128, 64), (64, 20)]
    params = {}
    keys = jax.random.split(key, 2 * len(dims))
    for i, (fan_in, fan_out) in enumerate(dims):
        bound = 1.0 / (fan_in ** 0.5)
        w = jax.random.uniform(keys[2 * i], (fan_in, fan_out),
                               minval=-bound, maxval=bound, dtype=jnp.float32)
        b = jax.random.uniform(keys[2 * i + 1], (1, fan_out),
                               minval=-bound, maxval=bound, dtype=jnp.float32)
        params[f"w{i + 1}"] = w
        params[f"b{i + 1}"] = b
    return params


def _reference_forward(x, params):
    h = jnp.maximum(x @ params["w1"] + params["b1"], 0.0)
    h = jnp.maximum(h @ params["w2"] + params["b2"], 0.0)
    h = jnp.maximum(h @ params["w3"] + params["b3"], 0.0)
    return h @ params["w4"] + params["b4"]


if __name__ == "__main__":
    key = jax.random.PRNGKey(0)
    pkey, xkey1, xkey2 = jax.random.split(key, 3)

    params = init_params(pkey)

    # --- exact f32 path: small batch, single grid step, tight tolerance ---
    params_f32 = prepare_params(params, use_bf16=False)
    x_small = jax.random.normal(xkey1, (8, 4), dtype=jnp.float32)
    out_small = jax.block_until_ready(pump_classifier_forward(x_small, params_f32))
    ref_small = _reference_forward(x_small, params)
    assert out_small.shape == (8, 20), out_small.shape
    assert jnp.allclose(out_small, ref_small, atol=1e-5, rtol=1e-5), \
        "mismatch vs reference (f32 path)"

    # --- bf16-matmul fast path: larger batch, 2 grid steps + batch padding ---
    params_fast = prepare_params(params, use_bf16=True)
    x_big = jax.random.normal(xkey2, (520, 4), dtype=jnp.float32)
    out_big = jax.block_until_ready(pump_classifier_forward(x_big, params_fast))
    ref_big = _reference_forward(x_big, params)
    assert out_big.shape == (520, 20), out_big.shape
    assert jnp.allclose(out_big, ref_big, atol=5e-2, rtol=5e-2), \
        "mismatch vs reference (bf16 path)"

    print("KERNEL_OK")
</pallas_src>

<mosaic_0001>
module attributes {stable_mosaic.version = 11 : i64} {
  func.func @_mlp_kernel(%arg0: i32, %arg1: memref<8x4xf32, #tpu.memory_space<vmem>>, %arg2: memref<4x64xf32, #tpu.memory_space<vmem>>, %arg3: memref<1x64xf32, #tpu.memory_space<vmem>>, %arg4: memref<64x128xf32, #tpu.memory_space<vmem>>, %arg5: memref<1x128xf32, #tpu.memory_space<vmem>>, %arg6: memref<128x64xf32, #tpu.memory_space<vmem>>, %arg7: memref<1x64xf32, #tpu.memory_space<vmem>>, %arg8: memref<64x20xf32, #tpu.memory_space<vmem>>, %arg9: memref<1x20xf32, #tpu.memory_space<vmem>>, %arg10: memref<8x20xf32, #tpu.memory_space<vmem>>) attributes {dimension_semantics = [#tpu.dimension_semantics<parallel>], iteration_bounds = array<i64: 1>, scalar_prefetch = 0 : i64, scratch_operands = 0 : i64, tpu.core_type = #tpu.core_type<tc>, window_params = [{transform_indices = @transform_0, window_bounds = array<i64: 8, 4>}, {pipeline_mode = #tpu.pipeline_mode<synchronous>, transform_indices = @transform_1, window_bounds = array<i64: 4, 64>}, {pipeline_mode = #tpu.pipeline_mode<synchronous>, transform_indices = @transform_2, window_bounds = array<i64: 1, 64>}, {pipeline_mode = #tpu.pipeline_mode<synchronous>, transform_indices = @transform_3, window_bounds = array<i64: 64, 128>}, {pipeline_mode = #tpu.pipeline_mode<synchronous>, transform_indices = @transform_4, window_bounds = array<i64: 1, 128>}, {pipeline_mode = #tpu.pipeline_mode<synchronous>, transform_indices = @transform_5, window_bounds = array<i64: 128, 64>}, {pipeline_mode = #tpu.pipeline_mode<synchronous>, transform_indices = @transform_6, window_bounds = array<i64: 1, 64>}, {pipeline_mode = #tpu.pipeline_mode<synchronous>, transform_indices = @transform_7, window_bounds = array<i64: 64, 20>}, {pipeline_mode = #tpu.pipeline_mode<synchronous>, transform_indices = @transform_8, window_bounds = array<i64: 1, 20>}, {transform_indices = @transform_9, window_bounds = array<i64: 8, 20>}]} {
    %c0 = arith.constant 0 : index
    %c0_0 = arith.constant 0 : index
    %0 = vector.load %arg1[%c0, %c0_0] : memref<8x4xf32, #tpu.memory_space<vmem>>, vector<8x4xf32>
    %c0_1 = arith.constant 0 : index
    %c0_2 = arith.constant 0 : index
    %1 = vector.load %arg2[%c0_1, %c0_2] : memref<4x64xf32, #tpu.memory_space<vmem>>, vector<4x64xf32>
    %c0_3 = arith.constant 0 : index
    %c0_4 = arith.constant 0 : index
    %2 = vector.load %arg3[%c0_3, %c0_4] : memref<1x64xf32, #tpu.memory_space<vmem>>, vector<1x64xf32>
    %3 = vector.extract_strided_slice %0 {offsets = [0, 0], sizes = [8, 1], strides = [1, 1]} : vector<8x4xf32> to vector<8x1xf32>
    %4 = vector.extract_strided_slice %1 {offsets = [0, 0], sizes = [1, 64], strides = [1, 1]} : vector<4x64xf32> to vector<1x64xf32>
    %5 = vector.broadcast %3 : vector<8x1xf32> to vector<8x64xf32>
    %6 = vector.broadcast %4 : vector<1x64xf32> to vector<8x64xf32>
    %7 = arith.mulf %5, %6 : vector<8x64xf32>
    %8 = vector.broadcast %2 : vector<1x64xf32> to vector<8x64xf32>
    %9 = arith.addf %8, %7 : vector<8x64xf32>
    %10 = vector.extract_strided_slice %0 {offsets = [0, 1], sizes = [8, 1], strides = [1, 1]} : vector<8x4xf32> to vector<8x1xf32>
    %11 = vector.extract_strided_slice %1 {offsets = [1, 0], sizes = [1, 64], strides = [1, 1]} : vector<4x64xf32> to vector<1x64xf32>
    %12 = vector.broadcast %10 : vector<8x1xf32> to vector<8x64xf32>
    %13 = vector.broadcast %11 : vector<1x64xf32> to vector<8x64xf32>
    %14 = arith.mulf %12, %13 : vector<8x64xf32>
    %15 = arith.addf %9, %14 : vector<8x64xf32>
    %16 = vector.extract_strided_slice %0 {offsets = [0, 2], sizes = [8, 1], strides = [1, 1]} : vector<8x4xf32> to vector<8x1xf32>
    %17 = vector.extract_strided_slice %1 {offsets = [2, 0], sizes = [1, 64], strides = [1, 1]} : vector<4x64xf32> to vector<1x64xf32>
    %18 = vector.broadcast %16 : vector<8x1xf32> to vector<8x64xf32>
    %19 = vector.broadcast %17 : vector<1x64xf32> to vector<8x64xf32>
    %20 = arith.mulf %18, %19 : vector<8x64xf32>
    %21 = arith.addf %15, %20 : vector<8x64xf32>
    %22 = vector.extract_strided_slice %0 {offsets = [0, 3], sizes = [8, 1], strides = [1, 1]} : vector<8x4xf32> to vector<8x1xf32>
    %23 = vector.extract_strided_slice %1 {offsets = [3, 0], sizes = [1, 64], strides = [1, 1]} : vector<4x64xf32> to vector<1x64xf32>
    %24 = vector.broadcast %22 : vector<8x1xf32> to vector<8x64xf32>
    %25 = vector.broadcast %23 : vector<1x64xf32> to vector<8x64xf32>
    %26 = arith.mulf %24, %25 : vector<8x64xf32>
    %27 = arith.addf %21, %26 : vector<8x64xf32>
    %cst = arith.constant 0.000000e+00 : f32
    %28 = vector.broadcast %cst : f32 to vector<8x64xf32>
    %29 = arith.maximumf %27, %28 : vector<8x64xf32>
    %c0_5 = arith.constant 0 : index
    %c0_6 = arith.constant 0 : index
    %30 = vector.load %arg4[%c0_5, %c0_6] : memref<64x128xf32, #tpu.memory_space<vmem>>, vector<64x128xf32>
    %cst_7 = arith.constant dense<0.000000e+00> : vector<8x128xf32>
    %31 = tpu.matmul %29, %30, %cst_7 {dimension_numbers = #tpu.dot_dimension_numbers<[1], [0], [0], [1], [0, 0, 1, 1], [], []>} : vector<8x64xf32>, vector<64x128xf32>, vector<8x128xf32> -> vector<8x128xf32>
    %c0_8 = arith.constant 0 : index
    %c0_9 = arith.constant 0 : index
    %32 = vector.load %arg5[%c0_8, %c0_9] : memref<1x128xf32, #tpu.memory_space<vmem>>, vector<1x128xf32>
    %33 = vector.broadcast %32 : vector<1x128xf32> to vector<8x128xf32>
    %34 = arith.addf %31, %33 : vector<8x128xf32>
    %cst_10 = arith.constant 0.000000e+00 : f32
    %35 = vector.broadcast %cst_10 : f32 to vector<8x128xf32>
    %36 = arith.maximumf %34, %35 : vector<8x128xf32>
    %c0_11 = arith.constant 0 : index
    %c0_12 = arith.constant 0 : index
    %37 = vector.load %arg6[%c0_11, %c0_12] : memref<128x64xf32, #tpu.memory_space<vmem>>, vector<128x64xf32>
    %cst_13 = arith.constant dense<0.000000e+00> : vector<8x64xf32>
    %38 = tpu.matmul %36, %37, %cst_13 {dimension_numbers = #tpu.dot_dimension_numbers<[1], [0], [0], [1], [0, 0, 1, 1], [], []>} : vector<8x128xf32>, vector<128x64xf32>, vector<8x64xf32> -> vector<8x64xf32>
    %c0_14 = arith.constant 0 : index
    %c0_15 = arith.constant 0 : index
    %39 = vector.load %arg7[%c0_14, %c0_15] : memref<1x64xf32, #tpu.memory_space<vmem>>, vector<1x64xf32>
    %40 = vector.broadcast %39 : vector<1x64xf32> to vector<8x64xf32>
    %41 = arith.addf %38, %40 : vector<8x64xf32>
    %cst_16 = arith.constant 0.000000e+00 : f32
    %42 = vector.broadcast %cst_16 : f32 to vector<8x64xf32>
    %43 = arith.maximumf %41, %42 : vector<8x64xf32>
    %c0_17 = arith.constant 0 : index
    %c0_18 = arith.constant 0 : index
    %44 = vector.load %arg8[%c0_17, %c0_18] : memref<64x20xf32, #tpu.memory_space<vmem>>, vector<64x20xf32>
    %cst_19 = arith.constant dense<0.000000e+00> : vector<8x20xf32>
    %45 = tpu.matmul %43, %44, %cst_19 {dimension_numbers = #tpu.dot_dimension_numbers<[1], [0], [0], [1], [0, 0, 1, 1], [], []>} : vector<8x64xf32>, vector<64x20xf32>, vector<8x20xf32> -> vector<8x20xf32>
    %c0_20 = arith.constant 0 : index
    %c0_21 = arith.constant 0 : index
    %46 = vector.load %arg9[%c0_20, %c0_21] : memref<1x20xf32, #tpu.memory_space<vmem>>, vector<1x20xf32>
    %47 = vector.broadcast %46 : vector<1x20xf32> to vector<8x20xf32>
    %48 = arith.addf %45, %47 : vector<8x20xf32>
    %c0_22 = arith.constant 0 : index
    %c0_23 = arith.constant 0 : index
    %49 = vector.load %arg10[%c0_22, %c0_23] : memref<8x20xf32, #tpu.memory_space<vmem>>, vector<8x20xf32>
    tpu.vector_store %arg10[%c0_22, %c0_23], %48 {strides = array<i32>} : memref<8x20xf32, #tpu.memory_space<vmem>>, vector<8x20xf32>,
    return
  }
  func.func @transform_0(%arg0: i32) -> (i32, i32) {
    %c0_i32 = arith.constant 0 : i32
    %c0_i32_0 = arith.constant 0 : i32
    return %arg0, %c0_i32 : i32, i32
  }
  func.func @transform_1(%arg0: i32) -> (i32, i32) {
    %c0_i32 = arith.constant 0 : i32
    %c0_i32_0 = arith.constant 0 : i32
    %c0_i32_1 = arith.constant 0 : i32
    return %c0_i32, %c0_i32_0 : i32, i32
  }
  func.func @transform_2(%arg0: i32) -> (i32, i32) {
    %c0_i32 = arith.constant 0 : i32
    %c0_i32_0 = arith.constant 0 : i32
    %c0_i32_1 = arith.constant 0 : i32
    return %c0_i32, %c0_i32_0 : i32, i32
  }
  func.func @transform_3(%arg0: i32) -> (i32, i32) {
    %c0_i32 = arith.constant 0 : i32
    %c0_i32_0 = arith.constant 0 : i32
    %c0_i32_1 = arith.constant 0 : i32
    return %c0_i32, %c0_i32_0 : i32, i32
  }
  func.func @transform_4(%arg0: i32) -> (i32, i32) {
    %c0_i32 = arith.constant 0 : i32
    %c0_i32_0 = arith.constant 0 : i32
    %c0_i32_1 = arith.constant 0 : i32
    return %c0_i32, %c0_i32_0 : i32, i32
  }
  func.func @transform_5(%arg0: i32) -> (i32, i32) {
    %c0_i32 = arith.constant 0 : i32
    %c0_i32_0 = arith.constant 0 : i32
    %c0_i32_1 = arith.constant 0 : i32
    return %c0_i32, %c0_i32_0 : i32, i32
  }
  func.func @transform_6(%arg0: i32) -> (i32, i32) {
    %c0_i32 = arith.constant 0 : i32
    %c0_i32_0 = arith.constant 0 : i32
    %c0_i32_1 = arith.constant 0 : i32
    return %c0_i32, %c0_i32_0 : i32, i32
  }
  func.func @transform_7(%arg0: i32) -> (i32, i32) {
    %c0_i32 = arith.constant 0 : i32
    %c0_i32_0 = arith.constant 0 : i32
    %c0_i32_1 = arith.constant 0 : i32
    return %c0_i32, %c0_i32_0 : i32, i32
  }
  func.func @transform_8(%arg0: i32) -> (i32, i32) {
    %c0_i32 = arith.constant 0 : i32
    %c0_i32_0 = arith.constant 0 : i32
    %c0_i32_1 = arith.constant 0 : i32
    return %c0_i32, %c0_i32_0 : i32, i32
  }
  func.func @transform_9(%arg0: i32) -> (i32, i32) {
    %c0_i32 = arith.constant 0 : i32
    %c0_i32_0 = arith.constant 0 : i32
    return %arg0, %c0_i32 : i32, i32
  }
}

</mosaic_0001>

<llo_original>
// kernel: tpu_custom_call.1
$region0: #{tpu_custom_call.1}
  #allocation0 [shape = 'u32[]', space=smem, size = 0x4, offset = 0x4, fixed_abs, tag = 'smem constant byte address 0x4 - core index']
  #allocation1 [shape = 'u32[144,128]{1,0:T(1,128)}', space=vmem, size = 0x12000, scoped, tag = 'internal scratch']
  %s0 = inlined_call_operand.vmem [shape: f32[8,4], index: 0, kind: input, shape index: {}]
  %s1 = inlined_call_operand.vmem [shape: f32[4,64], index: 1, kind: input, shape index: {}]
  %s2 = inlined_call_operand.vmem [shape: f32[1,64], index: 2, kind: input, shape index: {}]
  %s3 = inlined_call_operand.vmem [shape: f32[64,128], index: 3, kind: input, shape index: {}]
  %s4 = inlined_call_operand.vmem [shape: f32[1,128], index: 4, kind: input, shape index: {}]
  %s5 = inlined_call_operand.vmem [shape: f32[128,64], index: 5, kind: input, shape index: {}]
  %s6 = inlined_call_operand.vmem [shape: f32[1,64], index: 6, kind: input, shape index: {}]
  %s7 = inlined_call_operand.vmem [shape: f32[64,20], index: 7, kind: input, shape index: {}]
  %s8 = inlined_call_operand.vmem [shape: f32[1,20], index: 8, kind: input, shape index: {}]
  %s9 = inlined_call_operand.hbm [shape: f32[8,20], index: 9, kind: output, shape index: {}]
  %s10 = sld [smem:[#allocation0]]
  $region46: #{tpu_custom_call.1} parent=0
    _
  %s12 = ssub.s32 1, %s10
  %s13 = scalar_select 0, %s12, %s10
  $region1: #{tpu_custom_call.1} parent=0
    #allocation2 [shape = 'u8[4096]{0}', space=vmem, size = 0x1000, scoped, tag = 'output window, operand 0, single buffered']
    #allocation3 [shape = 's32[1]{0}', space=sflag, size = 0x4, scoped, tag = 'scoped memory for tpu_custom_call.1']
    %14 = vsyncpa [#allocation3], 0
    // Predicated region
    $region2: #{tpu_custom_call.1} parent=1 // pred_check
      _
    $region3: #{tpu_custom_call.1} parent=1 // pred_check_branch
      %16 = sbr.rel (0) target = $region5
    $region4: #{tpu_custom_call.1} parent=1 // pred_region
      _
    $region5: #{tpu_custom_call.1} parent=1 // pred_fallthru
      _
    // Predicated region
    $region6: #{tpu_custom_call.1} parent=1 // pred_check
      _
    $region7: #{tpu_custom_call.1} parent=1 // pred_check_branch
      %18 = sbr.rel (0) target = $region9
    $region8: #{tpu_custom_call.1} parent=1 // pred_region
      _
    $region9: #{tpu_custom_call.1} parent=1 // pred_fallthru
      _
    // Predicated region
    $region10: #{tpu_custom_call.1} parent=1 // pred_check
      _
    $region11: #{tpu_custom_call.1} parent=1 // pred_check_branch
      %20 = sbr.rel (0) target = $region13
    $region12: #{tpu_custom_call.1} parent=1 // pred_region
      _
    $region13: #{tpu_custom_call.1} parent=1 // pred_fallthru
      _
    // Predicated region
    $region14: #{tpu_custom_call.1} parent=1 // pred_check
      _
    $region15: #{tpu_custom_call.1} parent=1 // pred_check_branch
      %22 = sbr.rel (0) target = $region17
    $region16: #{tpu_custom_call.1} parent=1 // pred_region
      _
    $region17: #{tpu_custom_call.1} parent=1 // pred_fallthru
      _
    // Predicated region
    $region18: #{tpu_custom_call.1} parent=1 // pred_check
      _
    $region19: #{tpu_custom_call.1} parent=1 // pred_check_branch
      %24 = sbr.rel (0) target = $region21
    $region20: #{tpu_custom_call.1} parent=1 // pred_region
      _
    $region21: #{tpu_custom_call.1} parent=1 // pred_fallthru
      _
    // Predicated region
    $region22: #{tpu_custom_call.1} parent=1 // pred_check
      _
    $region23: #{tpu_custom_call.1} parent=1 // pred_check_branch
      %26 = sbr.rel (0) target = $region25
    $region24: #{tpu_custom_call.1} parent=1 // pred_region
      _
    $region25: #{tpu_custom_call.1} parent=1 // pred_fallthru
      _
    // Predicated region
    $region26: #{tpu_custom_call.1} parent=1 // pred_check
      _
    $region27: #{tpu_custom_call.1} parent=1 // pred_check_branch
      %28 = sbr.rel (0) target = $region29
    $region28: #{tpu_custom_call.1} parent=1 // pred_region
      _
    $region29: #{tpu_custom_call.1} parent=1 // pred_fallthru
      _
    // Predicated region
    $region30: #{tpu_custom_call.1} parent=1 // pred_check
      _
    $region31: #{tpu_custom_call.1} parent=1 // pred_check_branch
      %30 = sbr.rel (0) target = $region33
    $region32: #{tpu_custom_call.1} parent=1 // pred_region
      _
    $region33: #{tpu_custom_call.1} parent=1 // pred_fallthru
      _
    // Predicated region
    $region34: #{tpu_custom_call.1} parent=1 // pred_check
      _
    $region35: #{tpu_custom_call.1} parent=1 // pred_check_branch
      %32 = sbr.rel (0) target = $region37
    $region36: #{tpu_custom_call.1} parent=1 // pred_region
      _
    $region37: #{tpu_custom_call.1} parent=1 // pred_fallthru
      _
    %v33 = vld [vmem:[%s0] sm:$0xff]
    %v34 = vld [vmem:[%s1] sm:$0xf]
    %v35 = vld [vmem:[%s2] sm:$0x1]
    %37 = vset.pattern.permute.xlu0 0
    %38 = vperm.xlu0 %37, %v33
    %v39 = vpop.permute.xlu0 %38
    %v41 = vlaneseq
    %v42 = vshrl.u32 %v41, 7
    %v43 = vsub.s32 0, %v42
    %v44 = vrot.slane %v34, %v43
    %v45 = vmul.f32 %v39, %v44
    %v47 = vlaneseq
    %v48 = vshrl.u32 %v47, 7
    %v49 = vsub.s32 0, %v48
    %v50 = vrot.slane %v35, %v49
    %v52 = vadd.f32 %v50, %v45
    %53 = vset.pattern.permute.xlu0 1
    %54 = vperm.xlu0 %53, %v33
    %v55 = vpop.permute.xlu0 %54
    %v57 = vlaneseq
    %v58 = vshrl.u32 %v57, 7
    %v59 = vsub.s32 1, %v58
    %v60 = vrot.slane %v34, %v59
    %v61 = vmul.f32 %v55, %v60
    %v62 = vadd.f32 %v52, %v61
    %63 = vset.pattern.permute.xlu0 2
    %64 = vperm.xlu0 %63, %v33
    %v65 = vpop.permute.xlu0 %64
    %v67 = vlaneseq
    %v68 = vshrl.u32 %v67, 7
    %v69 = vsub.s32 2, %v68
    %v70 = vrot.slane %v34, %v69
    %v71 = vmul.f32 %v65, %v70
    %v72 = vadd.f32 %v62, %v71
    %73 = vset.pattern.permute.xlu0 3
    %74 = vperm.xlu0 %73, %v33
    %v75 = vpop.permute.xlu0 %74
    %v77 = vlaneseq
    %v78 = vshrl.u32 %v77, 7
    %v79 = vsub.s32 3, %v78
    %v80 = vrot.slane %v34, %v79
    %v81 = vmul.f32 %v75, %v80
    %v82 = vadd.f32 %v72, %v81
    %v83 = vmax.f32 %v82, 0.0
    %v84 = vld [vmem:[%s3] sm:$0xff]
    %v85 = vld [vmem:[%s3 + $0x8] sm:$0xff]
    %v86 = vld [vmem:[%s3 + $0x10] sm:$0xff]
    %v87 = vld [vmem:[%s3 + $0x18] sm:$0xff]
    %v88 = vld [vmem:[%s3 + $0x20] sm:$0xff]
    %v89 = vld [vmem:[%s3 + $0x28] sm:$0xff]
    %v90 = vld [vmem:[%s3 + $0x30] sm:$0xff]
    %v91 = vld [vmem:[%s3 + $0x38] sm:$0xff]
    %v92 = vld [vmem:[%s4] sm:$0x1]
    %v94 = vlaneseq
    %v95 = vshrl.u32 %v94, 7
    %v96 = vsub.s32 0, %v95
    %v97 = vrot.slane %v92, %v96
    %vm99 = vcmask 523264
    %v101 = vsel %vm99, %v83, 0
    %103 = vmatprep.subr.mxu0 0.0
    %104 = vmatpush1.msra.mxu0 %v84
    %105 = vmatprep.subr.mxu0 0.0
    %106 = vmatpush1.msra.mxu0 %v85
    %107 = vmatprep.subr.mxu0 0.0
    %108 = vmatpush1.msra.mxu0 %v86
    %109 = vmatprep.subr.mxu0 0.0
    %110 = vmatpush1.msra.mxu0 %v87
    %111 = vmatprep.subr.mxu0 0.0
    %112 = vmatpush1.msra.mxu0 %v88
    %113 = vmatprep.subr.mxu0 0.0
    %114 = vmatpush1.msra.mxu0 %v89
    %115 = vmatprep.subr.mxu0 0.0
    %116 = vmatpush1.msra.mxu0 %v90
    %117 = vmatprep.subr.mxu0 0.0
    %118 = vmatpush1.msra.mxu0 %v91
    %119 = vmatprep.subr.mxu0 0.0
    %120 = vmatpush1.msra.mxu0 0.0
    %121 = vmatprep.subr.mxu0 0.0
    %122 = vmatpush1.msra.mxu0 0.0
    %123 = vmatprep.subr.mxu0 0.0
    %124 = vmatpush1.msra.mxu0 0.0
    %125 = vmatprep.subr.mxu0 0.0
    %126 = vmatpush1.msra.mxu0 0.0
    %127 = vmatprep.subr.mxu0 0.0
    %128 = vmatpush1.msra.mxu0 0.0
    %129 = vmatprep.subr.mxu0 0.0
    %130 = vmatpush1.msra.mxu0 0.0
    %131 = vmatprep.subr.mxu0 0.0
    %132 = vmatpush1.msra.mxu0 0.0
    %133 = vmatprep.subr.mxu0 0.0
    %134 = vmatpush1.msra.mxu0 0.0
    %135 = vmatprep.subr.mxu0 0.0
    %136 = vmatpush1.msra.mxu0 0.0
    %137 = vmatprep.subr.mxu0 0.0
    %138 = vmatpush1.msra.mxu0 0.0
    %139 = vmatprep.subr.mxu0 0.0
    %140 = vmatpush1.msra.mxu0 0.0
    %141 = vmatprep.subr.mxu0 0.0
    %142 = vmatpush1.msra.mxu0 0.0
    %143 = vmatprep.subr.mxu0 0.0
    %144 = vmatpush1.msra.mxu0 0.0
    %145 = vmatprep.subr.mxu0 0.0
    %146 = vmatpush1.msra.mxu0 0.0
    %147 = vmatprep.subr.mxu0 0.0
    %148 = vmatpush1.msra.mxu0 0.0
    %149 = vmatprep.subr.mxu0 0.0
    %150 = vmatpush1.msra.mxu0 0.0
    %151 = vmatprep.subr.mxu0 0.0
    %152 = vmatpush1.msra.mxu0 0.0
    %153 = vmatprep.subr.mxu0 0.0
    %154 = vmatpush1.msra.mxu0 0.0
    %155 = vmatprep.subr.mxu0 0.0
    %156 = vmatpush1.msra.mxu0 0.0
    %157 = vmatprep.subr.mxu0 0.0
    %158 = vmatpush1.msra.mxu0 0.0
    %159 = vmatprep.subr.mxu0 0.0
    %160 = vmatpush1.msra.mxu0 0.0
    %161 = vmatprep.subr.mxu0 0.0
    %162 = vmatpush1.msra.mxu0 0.0
    %163 = vmatprep.subr.mxu0 0.0
    %164 = vmatpush1.msra.mxu0 0.0
    %165 = vmatprep.subr.mxu0 0.0
    %166 = vmatpush1.msra.mxu0 0.0
    %167 = vmatprep.mubr.f32.mxu0 0.0
    %168 = vmatmul.mubr.f32.gmra.mrb[0].mxu0 %v101
    %v169 = vpop.f32.mrb[0].mxu0
    %v170 = vadd.f32 %v97, %v169
    %v171 = vpop.f32.mrb[0].mxu0
    %172 = vdwg.mxu0
    %v173 = vmax.f32 %v170, 0.0
    %v174 = vld [vmem:[%s5] sm:$0xff]
    %v175 = vld [vmem:[%s5 + $0x8] sm:$0xff]
    %v176 = vld [vmem:[%s5 + $0x10] sm:$0xff]
    %v177 = vld [vmem:[%s5 + $0x18] sm:$0xff]
    %v178 = vld [vmem:[%s5 + $0x20] sm:$0xff]
    %v179 = vld [vmem:[%s5 + $0x28] sm:$0xff]
    %v180 = vld [vmem:[%s5 + $0x30] sm:$0xff]
    %v181 = vld [vmem:[%s5 + $0x38] sm:$0xff]
    %v182 = vld [vmem:[%s5 + $0x40] sm:$0xff]
    %v183 = vld [vmem:[%s5 + $0x48] sm:$0xff]
    %v184 = vld [vmem:[%s5 + $0x50] sm:$0xff]
    %v185 = vld [vmem:[%s5 + $0x58] sm:$0xff]
    %v186 = vld [vmem:[%s5 + $0x60] sm:$0xff]
    %v187 = vld [vmem:[%s5 + $0x68] sm:$0xff]
    %v188 = vld [vmem:[%s5 + $0x70] sm:$0xff]
    %v189 = vld [vmem:[%s5 + $0x78] sm:$0xff]
    %v190 = vld [vmem:[%s6] sm:$0x1]
    %v192 = vlaneseq
    %v193 = vshrl.u32 %v192, 7
    %v194 = vsub.s32 0, %v193
    %v195 = vrot.slane %v190, %v194
    %197 = vmatprep.subr.mxu0 0.0
    %198 = vmatpush1.msra.mxu0 %v174
    %199 = vmatprep.subr.mxu0 0.0
    %200 = vmatpush1.msra.mxu0 %v175
    %201 = vmatprep.subr.mxu0 0.0
    %202 = vmatpush1.msra.mxu0 %v176
    %203 = vmatprep.subr.mxu0 0.0
    %204 = vmatpush1.msra.mxu0 %v177
    %205 = vmatprep.subr.mxu0 0.0
    %206 = vmatpush1.msra.mxu0 %v178
    %207 = vmatprep.subr.mxu0 0.0
    %208 = vmatpush1.msra.mxu0 %v179
    %209 = vmatprep.subr.mxu0 0.0
    %210 = vmatpush1.msra.mxu0 %v180
    %211 = vmatprep.subr.mxu0 0.0
    %212 = vmatpush1.msra.mxu0 %v181
    %213 = vmatprep.subr.mxu0 0.0
    %214 = vmatpush1.msra.mxu0 %v182
    %215 = vmatprep.subr.mxu0 0.0
    %216 = vmatpush1.msra.mxu0 %v183
    %217 = vmatprep.subr.mxu0 0.0
    %218 = vmatpush1.msra.mxu0 %v184
    %219 = vmatprep.subr.mxu0 0.0
    %220 = vmatpush1.msra.mxu0 %v185
    %221 = vmatprep.subr.mxu0 0.0
    %222 = vmatpush1.msra.mxu0 %v186
    %223 = vmatprep.subr.mxu0 0.0
    %224 = vmatpush1.msra.mxu0 %v187
    %225 = vmatprep.subr.mxu0 0.0
    %226 = vmatpush1.msra.mxu0 %v188
    %227 = vmatprep.subr.mxu0 0.0
    %228 = vmatpush1.msra.mxu0 %v189
    %229 = vmatprep.subr.mxu0 0.0
    %230 = vmatpush1.msra.mxu0 0.0
    %231 = vmatprep.subr.mxu0 0.0
    %232 = vmatpush1.msra.mxu0 0.0
    %233 = vmatprep.subr.mxu0 0.0
    %234 = vmatpush1.msra.mxu0 0.0
    %235 = vmatprep.subr.mxu0 0.0
    %236 = vmatpush1.msra.mxu0 0.0
    %237 = vmatprep.subr.mxu0 0.0
    %238 = vmatpush1.msra.mxu0 0.0
    %239 = vmatprep.subr.mxu0 0.0
    %240 = vmatpush1.msra.mxu0 0.0
    %241 = vmatprep.subr.mxu0 0.0
    %242 = vmatpush1.msra.mxu0 0.0
    %243 = vmatprep.subr.mxu0 0.0
    %244 = vmatpush1.msra.mxu0 0.0
    %245 = vmatprep.subr.mxu0 0.0
    %246 = vmatpush1.msra.mxu0 0.0
    %247 = vmatprep.subr.mxu0 0.0
    %248 = vmatpush1.msra.mxu0 0.0
    %249 = vmatprep.subr.mxu0 0.0
    %250 = vmatpush1.msra.mxu0 0.0
    %251 = vmatprep.subr.mxu0 0.0
    %252 = vmatpush1.msra.mxu0 0.0
    %253 = vmatprep.subr.mxu0 0.0
    %254 = vmatpush1.msra.mxu0 0.0
    %255 = vmatprep.subr.mxu0 0.0
    %256 = vmatpush1.msra.mxu0 0.0
    %257 = vmatprep.subr.mxu0 0.0
    %258 = vmatpush1.msra.mxu0 0.0
    %259 = vmatprep.subr.mxu0 0.0
    %260 = vmatpush1.msra.mxu0 0.0
    %261 = vmatprep.mubr.f32.mxu0 0.0
    %262 = vmatmul.mubr.f32.gmra.mrb[0].mxu0 %v173
    %v263 = vpop.f32.mrb[0].mxu0
    %v264 = vadd.f32 %v195, %v263
    %v265 = vpop.f32.mrb[0].mxu0
    %266 = vdwg.mxu0
    %v267 = vmax.f32 %v264, 0.0
    %v268 = vld [vmem:[%s7] sm:$0xff]
    %v269 = vld [vmem:[%s7 + $0x8] sm:$0xff]
    %v270 = vld [vmem:[%s7 + $0x10] sm:$0xff]
    %v271 = vld [vmem:[%s7 + $0x18] sm:$0xff]
    %v272 = vld [vmem:[%s7 + $0x20] sm:$0xff]
    %v273 = vld [vmem:[%s7 + $0x28] sm:$0xff]
    %v274 = vld [vmem:[%s7 + $0x30] sm:$0xff]
    %v275 = vld [vmem:[%s7 + $0x38] sm:$0xff]
    %v276 = vld [vmem:[%s8] sm:$0x1]
    %v278 = vlaneseq
    %v279 = vshrl.u32 %v278, 7
    %v280 = vsub.s32 0, %v279
    %v281 = vrot.slane %v276, %v280
    %v284 = vsel %vm99, %v267, 0
    %286 = vmatprep.subr.mxu0 0.0
    %287 = vmatpush1.msra.mxu0 %v268
    %288 = vmatprep.subr.mxu0 0.0
    %289 = vmatpush1.msra.mxu0 %v269
    %290 = vmatprep.subr.mxu0 0.0
    %291 = vmatpush1.msra.mxu0 %v270
    %292 = vmatprep.subr.mxu0 0.0
    %293 = vmatpush1.msra.mxu0 %v271
    %294 = vmatprep.subr.mxu0 0.0
    %295 = vmatpush1.msra.mxu0 %v272
    %296 = vmatprep.subr.mxu0 0.0
    %297 = vmatpush1.msra.mxu0 %v273
    %298 = vmatprep.subr.mxu0 0.0
    %299 = vmatpush1.msra.mxu0 %v274
    %300 = vmatprep.subr.mxu0 0.0
    %301 = vmatpush1.msra.mxu0 %v275
    %302 = vmatprep.subr.mxu0 0.0
    %303 = vmatpush1.msra.mxu0 0.0
    %304 = vmatprep.subr.mxu0 0.0
    %305 = vmatpush1.msra.mxu0 0.0
    %306 = vmatprep.subr.mxu0 0.0
    %307 = vmatpush1.msra.mxu0 0.0
    %308 = vmatprep.subr.mxu0 0.0
    %309 = vmatpush1.msra.mxu0 0.0
    %310 = vmatprep.subr.mxu0 0.0
    %311 = vmatpush1.msra.mxu0 0.0
    %312 = vmatprep.subr.mxu0 0.0
    %313 = vmatpush1.msra.mxu0 0.0
    %314 = vmatprep.subr.mxu0 0.0
    %315 = vmatpush1.msra.mxu0 0.0
    %316 = vmatprep.subr.mxu0 0.0
    %317 = vmatpush1.msra.mxu0 0.0
    %318 = vmatprep.subr.mxu0 0.0
    %319 = vmatpush1.msra.mxu0 0.0
    %320 = vmatprep.subr.mxu0 0.0
    %321 = vmatpush1.msra.mxu0 0.0
    %322 = vmatprep.subr.mxu0 0.0
    %323 = vmatpush1.msra.mxu0 0.0
    %324 = vmatprep.subr.mxu0 0.0
    %325 = vmatpush1.msra.mxu0 0.0
    %326 = vmatprep.subr.mxu0 0.0
    %327 = vmatpush1.msra.mxu0 0.0
    %328 = vmatprep.subr.mxu0 0.0
    %329 = vmatpush1.msra.mxu0 0.0
    %330 = vmatprep.subr.mxu0 0.0
    %331 = vmatpush1.msra.mxu0 0.0
    %332 = vmatprep.subr.mxu0 0.0
    %333 = vmatpush1.msra.mxu0 0.0
    %334 = vmatprep.subr.mxu0 0.0
    %335 = vmatpush1.msra.mxu0 0.0
    %336 = vmatprep.subr.mxu0 0.0
    %337 = vmatpush1.msra.mxu0 0.0
    %338 = vmatprep.subr.mxu0 0.0
    %339 = vmatpush1.msra.mxu0 0.0
    %340 = vmatprep.subr.mxu0 0.0
    %341 = vmatpush1.msra.mxu0 0.0
    %342 = vmatprep.subr.mxu0 0.0
    %343 = vmatpush1.msra.mxu0 0.0
    %344 = vmatprep.subr.mxu0 0.0
    %345 = vmatpush1.msra.mxu0 0.0
    %346 = vmatprep.subr.mxu0 0.0
    %347 = vmatpush1.msra.mxu0 0.0
    %348 = vmatprep.subr.mxu0 0.0
    %349 = vmatpush1.msra.mxu0 0.0
    %350 = vmatprep.mubr.f32.mxu0 0.0
    %351 = vmatmul.mubr.f32.gmra.mrb[0].mxu0 %v284
    %v352 = vpop.f32.mrb[0].mxu0
    %v353 = vadd.f32 %v281, %v352
    %v354 = vpop.f32.mrb[0].mxu0
    %355 = vdwg.mxu0
    %vm356 = vcmask 162816
    %357 = vst.msk [vmem:[#allocation2] sm:$0xff] %vm356, %v353
    // Predicated region
    $region38: #{tpu_custom_call.1} parent=1 // pred_check
      _
    $region39: #{tpu_custom_call.1} parent=1 // pred_check_branch
      %359 = sbr.rel (0) target = $region41
    $region40: #{tpu_custom_call.1} parent=1 // pred_region
      %s361 = ssub.s32 128, 128
      %362 = vsyncadd [#allocation3], %s361
      %s364 = sshll.u32 [#allocation2], 4
      %s365 = int_to_ptr.vmem [resolvable:$true] %s364
      %367 = dma.vmem_to_hbm [thread:$0]  %s365, 128, %s9, [#allocation3]
    $region41: #{tpu_custom_call.1} parent=1 // pred_fallthru
      _
    // Predicated region
    $region42: #{tpu_custom_call.1} parent=1 // pred_check
      _
    $region43: #{tpu_custom_call.1} parent=1 // pred_check_branch
      %369 = sbr.rel (0) target = $region45
    $region44: #{tpu_custom_call.1} parent=1 // pred_region
      %370 = dma.done [#allocation3], 128
    $region45: #{tpu_custom_call.1} parent=1 // pred_fallthru
      _
    %371 = vsyncpa [#allocation3], 1

</llo_original>
